<compile_context>
chip_gen: v7x
topology: tpu7x:2x2x1
jax: 0.10.0
libtpu: 0.0.40
codegen_flags: <defaults>
</compile_context>

<pallas_src>
import functools

import jax
import jax.numpy as jnp
from jax import lax
from jax.experimental import pallas as pl
from jax.experimental.pallas import tpu as pltpu

EPS = 1e-5  # PyTorch nn.LayerNorm default


def _round_up(x, m):
    return (x + m - 1) // m * m


def _vmem_capacity_bytes():
    try:
        return int(pltpu.get_tpu_info().vmem_capacity_bytes)
    except Exception:
        return 64 * 1024 * 1024  # v7x per-TC floor; v5e/v6e have 128 MiB


def _norm_group(y, g, ch, gamma, beta):
    """Two-pass LayerNorm (torch semantics) on group g of the expanded vector.

    y: (tok, 4*ch) f32; returns (tok, ch) f32.
    """
    seg = y[:, g * ch:(g + 1) * ch]
    inv = jnp.float32(1.0 / ch)
    mu = jnp.sum(seg, axis=-1, keepdims=True) * inv
    d = seg - mu
    var = jnp.sum(d * d, axis=-1, keepdims=True) * inv      # biased, like torch
    return d * lax.rsqrt(var + EPS) * gamma + beta


def _fused_kernel(x_ref, w_ref, g_ref, b_ref, o_ref, *, ch, W):
    """Expand + per-group LayerNorm + fused P1/P2 scatter for `rows` W-rows.

    x_ref : (rows, W, C)      input tokens (native dtype)
    w_ref : (C, 2C)           pre-transposed expand weight
    g_ref : (1, ch)           LayerNorm gamma (ch = C // 2)
    b_ref : (1, ch)           LayerNorm beta
    o_ref : (rows, 2, W, C)   scatter target; wrapper reshape to [B,2H,2W,ch] is free
    """
    rows = x_ref.shape[0]
    C = x_ref.shape[2]
    tok = rows * W

    # W % 8 == 0 -> collapsing (rows, W) into the sublane dim keeps tile layout.
    x = x_ref[...].reshape(tok, C)
    y = jnp.dot(x, w_ref[...], preferred_element_type=jnp.float32)  # (tok, 4*ch) f32

    gamma = g_ref[...].astype(jnp.float32)
    beta = b_ref[...].astype(jnp.float32)

    for p1 in range(2):
        if ch % 128 == 0:
            # Lane-aligned groups: store each directly (no concat temp, stores
            # stay unmasked full vregs).
            for p2 in range(2):
                norm = _norm_group(y, 2 * p1 + p2, ch, gamma, beta)
                o_ref[:, p1, :, p2 * ch:(p2 + 1) * ch] = (
                    norm.reshape(rows, W, ch).astype(o_ref.dtype))
        else:
            half = jnp.concatenate(
                [_norm_group(y, 2 * p1 + p2, ch, gamma, beta) for p2 in range(2)],
                axis=-1)                                     # (tok, 2*ch) f32
            o_ref[:, p1, :, :] = half.reshape(rows, W, 2 * ch).astype(o_ref.dtype)


def _flat_kernel(x_ref, w_ref, g_ref, b_ref, o_ref, *, ch):
    """Fallback: expand + per-group LayerNorm on a flat (tm, C) token tile."""
    y = jnp.dot(x_ref[...], w_ref[...], preferred_element_type=jnp.float32)
    gamma = g_ref[...].astype(jnp.float32)
    beta = b_ref[...].astype(jnp.float32)
    if ch % 128 == 0:
        for g in range(4):
            o_ref[:, g * ch:(g + 1) * ch] = _norm_group(
                y, g, ch, gamma, beta).astype(o_ref.dtype)
    else:
        o_ref[...] = jnp.concatenate(
            [_norm_group(y, g, ch, gamma, beta) for g in range(4)], axis=-1
        ).astype(o_ref.dtype)


def _tile_estimate(tok, C, itemsize):
    # double-buffered in (C) + out (2C) tiles, f32 matmul acc + norm temps,
    # double-buffered resident weight, upcast gamma/beta.
    return (2 * tok * 3 * C * itemsize
            + 3 * tok * 2 * C * 4
            + 2 * 2 * C * C * itemsize
            + 4 * C * 4)


def _pick_rows_per_tile(R, W, C, itemsize, budget, target_tokens=2048):
    """Largest divisor of R (rows of W tokens) fitting the VMEM budget."""
    best = 1
    for d in range(1, R + 1):
        if R % d:
            continue
        if d > 1 and d * W > target_tokens:
            break
        if _tile_estimate(d * W, C, itemsize) > budget:
            break
        if R >= 2 and R // d < 2:
            # keep >= 2 grid steps so v7x's two TensorCores both get work
            continue
        best = d
    return best


def _pick_flat_tile(N, C, itemsize, budget, min_tm, target_tokens=2048):
    """Prefer an exact divisor of N (no pad/slice HBM copies); else pad."""
    best = None
    tm = min_tm
    while tm <= min(N, target_tokens):
        if (N % tm == 0 and _tile_estimate(tm, C, itemsize) <= budget
                and (N // tm >= 2 or N <= min_tm)):
            best = tm
        tm += min_tm
    if best is not None:
        return best, False
    tm = min_tm
    while (tm * 2 <= target_tokens and tm * 2 <= max(N, min_tm)
           and _tile_estimate(tm * 2, C, itemsize) <= budget):
        tm *= 2
    return tm, True


def patch_expanding(x, w_expand, gamma, beta):
    """x: [B, H, W, C] -> [B, 2H, 2W, C//2]

    w_expand: PyTorch nn.Linear(dim, 2*dim, bias=False) weight, shape (2C, C)
    gamma, beta: nn.LayerNorm(C // 2) affine params, shape (C//2,)
    """
    B, H, W, C = x.shape
    assert C % 2 == 0
    ch = C // 2
    N = B * H * W
    R = B * H

    itemsize = jnp.dtype(x.dtype).itemsize
    min_tm = max(8, 32 // itemsize)  # sublane packing: 8 rows f32, 16 bf16, 32 int8

    # One-time weight transpose to (C, 2C): canonical (tok, K) x (K, N) MXU
    # operand shape, no per-tile RHS transpose inside the kernel.
    w_t = jnp.transpose(w_expand).astype(x.dtype)
    g2d = gamma.reshape(1, ch)
    b2d = beta.reshape(1, ch)

    cap = _vmem_capacity_bytes()
    budget = int(0.45 * cap)          # tile I/O + f32 temps + resident weight
    vmem_limit = int(0.70 * cap)

    cost = pl.CostEstimate(
        flops=2 * N * C * 2 * C + 16 * N * C,
        transcendentals=4 * N,        # one rsqrt per (token, group)
        bytes_accessed=(N * C * itemsize + N * 2 * C * itemsize
                        + 2 * C * C * itemsize + 4 * ch * 4),
    )
    compiler_params = pltpu.CompilerParams(
        dimension_semantics=("parallel",),
        vmem_limit_bytes=vmem_limit,
    )

    if W % 8 == 0:
        # --- Fused path: rearrange folded into the out_spec scatter. ---
        rows = _pick_rows_per_tile(R, W, C, itemsize, budget)
        x3 = x.reshape(R, W, C)       # free view
        kernel = functools.partial(_fused_kernel, ch=ch, W=W)
        y4 = pl.pallas_call(
            kernel,
            out_shape=jax.ShapeDtypeStruct((R, 2, W, C), x.dtype),
            grid_spec=pltpu.PrefetchScalarGridSpec(
                num_scalar_prefetch=0,
                grid=(R // rows,),
                in_specs=[
                    pl.BlockSpec((rows, W, C), lambda i: (i, 0, 0)),
                    pl.BlockSpec((C, 2 * C), lambda i: (0, 0)),  # resident weight
                    pl.BlockSpec((1, ch), lambda i: (0, 0)),
                    pl.BlockSpec((1, ch), lambda i: (0, 0)),
                ],
                out_specs=pl.BlockSpec((rows, 2, W, C), lambda i: (i, 0, 0, 0)),
            ),
            compiler_params=compiler_params,
            cost_estimate=cost,
        )(x3, w_t, g2d, b2d)
        # (B*H, 2, W, 2*ch) row-major == (B, 2H, 2W, ch): pure (free) reshape.
        return y4.reshape(B, 2 * H, 2 * W, ch)

    # --- Fallback path (W not sublane-aligned): flat tokens + XLA rearrange. ---
    tm, need_pad = _pick_flat_tile(N, C, itemsize, budget, min_tm)
    x2d = x.reshape(N, C)
    Np = N
    if need_pad:
        Np = _round_up(N, tm)
        if Np != N:
            # Zero rows stay finite through the LayerNorm; sliced off below.
            x2d = jnp.pad(x2d, ((0, Np - N), (0, 0)))

    kernel = functools.partial(_flat_kernel, ch=ch)
    y2d = pl.pallas_call(
        kernel,
        out_shape=jax.ShapeDtypeStruct((Np, 2 * C), x.dtype),
        grid_spec=pltpu.PrefetchScalarGridSpec(
            num_scalar_prefetch=0,
            grid=(Np // tm,),
            in_specs=[
                pl.BlockSpec((tm, C), lambda i: (i, 0)),
                pl.BlockSpec((C, 2 * C), lambda i: (0, 0)),      # resident weight
                pl.BlockSpec((1, ch), lambda i: (0, 0)),
                pl.BlockSpec((1, ch), lambda i: (0, 0)),
            ],
            out_specs=pl.BlockSpec((tm, 2 * C), lambda i: (i, 0)),
        ),
        compiler_params=compiler_params,
        cost_estimate=cost,
    )(x2d, w_t, g2d, b2d)

    if Np != N:
        y2d = y2d[:N]

    # Glue rearrange 'B H W (P1 P2 C) -> B (H P1) (W P2) C', P1 = P2 = 2.
    y = y2d.reshape(B, H, W, 2, 2, ch)
    y = jnp.transpose(y, (0, 1, 3, 2, 4, 5))
    return y.reshape(B, 2 * H, 2 * W, ch)


def _reference(x, w_expand, gamma, beta):
    B, H, W, C = x.shape
    ch = C // 2
    y = jnp.einsum("bhwc,oc->bhwo", x, w_expand)             # Linear, no bias
    y = y.reshape(B, H, W, 2, 2, ch)
    y = jnp.transpose(y, (0, 1, 3, 2, 4, 5)).reshape(B, 2 * H, 2 * W, ch)
    mu = jnp.mean(y, axis=-1, keepdims=True)
    var = jnp.mean((y - mu) ** 2, axis=-1, keepdims=True)
    return (y - mu) * lax.rsqrt(var + EPS) * gamma + beta


def _make_params(key, dim, dtype=jnp.float32):
    k_w, k_g, k_b = jax.random.split(key, 3)
    # Shapes per module __init__:
    #   expand.weight : (2*dim, dim)   -- nn.Linear(dim, 2*dim, bias=False)
    #   norm.weight   : (dim//2,)      -- nn.LayerNorm(dim // 2)
    #   norm.bias     : (dim//2,)
    w = jax.random.normal(k_w, (2 * dim, dim), dtype=dtype) * 0.05
    g = 1.0 + 0.1 * jax.random.normal(k_g, (dim // 2,), dtype=dtype)
    b = 0.1 * jax.random.normal(k_b, (dim // 2,), dtype=dtype)
    return w, g, b


if __name__ == "__main__":
    key = jax.random.PRNGKey(0)

    cases = [
        (1, 2, 8, 256),   # fused path, lane-aligned groups (direct group stores)
        (2, 4, 8, 64),    # fused path, narrow channels (concat-store branch)
        (2, 4, 7, 32),    # fallback path (W % 8 != 0): flat tiles + XLA rearrange
    ]
    for idx, (B, H, W, dim) in enumerate(cases):
        k_x, k_p, key = jax.random.split(key, 3)
        x = jax.random.normal(k_x, (B, H, W, dim), dtype=jnp.float32)
        w_expand, gamma, beta = _make_params(k_p, dim)

        out = jax.block_until_ready(patch_expanding(x, w_expand, gamma, beta))
        ref = _reference(x, w_expand, gamma, beta)

        assert out.shape == (B, 2 * H, 2 * W, dim // 2), (idx, out.shape)
        assert jnp.allclose(out, ref, atol=1e-3, rtol=1e-3), (
            f"mismatch vs reference (case {idx})")

    print("KERNEL_OK")
</pallas_src>

<mosaic_0001>
module attributes {stable_mosaic.version = 11 : i64} {
  func.func @_fused_kernel(%arg0: i32, %arg1: memref<1x8x256xf32, #tpu.memory_space<vmem>>, %arg2: memref<256x512xf32, #tpu.memory_space<vmem>>, %arg3: memref<1x128xf32, #tpu.memory_space<vmem>>, %arg4: memref<1x128xf32, #tpu.memory_space<vmem>>, %arg5: memref<1x2x8x256xf32, #tpu.memory_space<vmem>>) attributes {dimension_semantics = [#tpu.dimension_semantics<parallel>], iteration_bounds = array<i64: 2>, scalar_prefetch = 0 : i64, scratch_operands = 0 : i64, tpu.core_type = #tpu.core_type<tc>, window_params = [{transform_indices = @transform_0, window_bounds = array<i64: 1, 8, 256>}, {pipeline_mode = #tpu.pipeline_mode<synchronous>, transform_indices = @transform_1, window_bounds = array<i64: 256, 512>}, {pipeline_mode = #tpu.pipeline_mode<synchronous>, transform_indices = @transform_2, window_bounds = array<i64: 1, 128>}, {pipeline_mode = #tpu.pipeline_mode<synchronous>, transform_indices = @transform_3, window_bounds = array<i64: 1, 128>}, {transform_indices = @transform_4, window_bounds = array<i64: 1, 2, 8, 256>}]} {
    %c0 = arith.constant 0 : index
    %c0_0 = arith.constant 0 : index
    %c0_1 = arith.constant 0 : index
    %0 = vector.load %arg1[%c0, %c0_0, %c0_1] : memref<1x8x256xf32, #tpu.memory_space<vmem>>, vector<1x8x256xf32>
    %1 = vector.shape_cast %0 : vector<1x8x256xf32> to vector<8x256xf32>
    %c0_2 = arith.constant 0 : index
    %c0_3 = arith.constant 0 : index
    %2 = vector.load %arg2[%c0_2, %c0_3] : memref<256x512xf32, #tpu.memory_space<vmem>>, vector<256x512xf32>
    %cst = arith.constant dense<0.000000e+00> : vector<8x512xf32>
    %3 = tpu.matmul %1, %2, %cst {dimension_numbers = #tpu.dot_dimension_numbers<[1], [0], [0], [1], [0, 0, 1, 1], [], []>} : vector<8x256xf32>, vector<256x512xf32>, vector<8x512xf32> -> vector<8x512xf32>
    %c0_4 = arith.constant 0 : index
    %c0_5 = arith.constant 0 : index
    %4 = vector.load %arg3[%c0_4, %c0_5] : memref<1x128xf32, #tpu.memory_space<vmem>>, vector<1x128xf32>
    %c0_6 = arith.constant 0 : index
    %c0_7 = arith.constant 0 : index
    %5 = vector.load %arg4[%c0_6, %c0_7] : memref<1x128xf32, #tpu.memory_space<vmem>>, vector<1x128xf32>
    %6 = vector.extract_strided_slice %3 {offsets = [0, 0], sizes = [8, 128], strides = [1, 1]} : vector<8x512xf32> to vector<8x128xf32>
    %cst_8 = arith.constant dense<0.000000e+00> : vector<8xf32>
    %7 = vector.multi_reduction <add>, %6, %cst_8 [1] : vector<8x128xf32> to vector<8xf32>
    %8 = vector.shape_cast %7 : vector<8xf32> to vector<8x1xf32>
    %cst_9 = arith.constant 7.812500e-03 : f32
    %9 = vector.broadcast %cst_9 : f32 to vector<8x1xf32>
    %10 = arith.mulf %8, %9 : vector<8x1xf32>
    %11 = vector.broadcast %10 : vector<8x1xf32> to vector<8x128xf32>
    %12 = arith.subf %6, %11 : vector<8x128xf32>
    %13 = arith.mulf %12, %12 : vector<8x128xf32>
    %cst_10 = arith.constant dense<0.000000e+00> : vector<8xf32>
    %14 = vector.multi_reduction <add>, %13, %cst_10 [1] : vector<8x128xf32> to vector<8xf32>
    %15 = vector.shape_cast %14 : vector<8xf32> to vector<8x1xf32>
    %cst_11 = arith.constant 7.812500e-03 : f32
    %16 = vector.broadcast %cst_11 : f32 to vector<8x1xf32>
    %17 = arith.mulf %15, %16 : vector<8x1xf32>
    %cst_12 = arith.constant 9.99999974E-6 : f32
    %18 = vector.broadcast %cst_12 : f32 to vector<8x1xf32>
    %19 = arith.addf %17, %18 : vector<8x1xf32>
    %20 = math.rsqrt %19 : vector<8x1xf32>
    %21 = vector.broadcast %20 : vector<8x1xf32> to vector<8x128xf32>
    %22 = arith.mulf %12, %21 : vector<8x128xf32>
    %23 = vector.broadcast %4 : vector<1x128xf32> to vector<8x128xf32>
    %24 = arith.mulf %22, %23 : vector<8x128xf32>
    %25 = vector.broadcast %5 : vector<1x128xf32> to vector<8x128xf32>
    %26 = arith.addf %24, %25 : vector<8x128xf32>
    %27 = vector.shape_cast %26 : vector<8x128xf32> to vector<1x8x128xf32>
    %c0_13 = arith.constant 0 : index
    %c0_14 = arith.constant 0 : index
    %c0_15 = arith.constant 0 : index
    %c0_16 = arith.constant 0 : index
    %28 = vector.load %arg5[%c0_13, %c0_14, %c0_15, %c0_16] : memref<1x2x8x256xf32, #tpu.memory_space<vmem>>, vector<1x1x8x128xf32>
    %29 = vector.shape_cast %28 : vector<1x1x8x128xf32> to vector<1x8x128xf32>
    %30 = vector.shape_cast %27 : vector<1x8x128xf32> to vector<1x1x8x128xf32>
    tpu.vector_store %arg5[%c0_13, %c0_14, %c0_15, %c0_16], %30 {strides = array<i32>} : memref<1x2x8x256xf32, #tpu.memory_space<vmem>>, vector<1x1x8x128xf32>,
    %31 = vector.extract_strided_slice %3 {offsets = [0, 128], sizes = [8, 128], strides = [1, 1]} : vector<8x512xf32> to vector<8x128xf32>
    %cst_17 = arith.constant dense<0.000000e+00> : vector<8xf32>
    %32 = vector.multi_reduction <add>, %31, %cst_17 [1] : vector<8x128xf32> to vector<8xf32>
    %33 = vector.shape_cast %32 : vector<8xf32> to vector<8x1xf32>
    %cst_18 = arith.constant 7.812500e-03 : f32
    %34 = vector.broadcast %cst_18 : f32 to vector<8x1xf32>
    %35 = arith.mulf %33, %34 : vector<8x1xf32>
    %36 = vector.broadcast %35 : vector<8x1xf32> to vector<8x128xf32>
    %37 = arith.subf %31, %36 : vector<8x128xf32>
    %38 = arith.mulf %37, %37 : vector<8x128xf32>
    %cst_19 = arith.constant dense<0.000000e+00> : vector<8xf32>
    %39 = vector.multi_reduction <add>, %38, %cst_19 [1] : vector<8x128xf32> to vector<8xf32>
    %40 = vector.shape_cast %39 : vector<8xf32> to vector<8x1xf32>
    %cst_20 = arith.constant 7.812500e-03 : f32
    %41 = vector.broadcast %cst_20 : f32 to vector<8x1xf32>
    %42 = arith.mulf %40, %41 : vector<8x1xf32>
    %cst_21 = arith.constant 9.99999974E-6 : f32
    %43 = vector.broadcast %cst_21 : f32 to vector<8x1xf32>
    %44 = arith.addf %42, %43 : vector<8x1xf32>
    %45 = math.rsqrt %44 : vector<8x1xf32>
    %46 = vector.broadcast %45 : vector<8x1xf32> to vector<8x128xf32>
    %47 = arith.mulf %37, %46 : vector<8x128xf32>
    %48 = vector.broadcast %4 : vector<1x128xf32> to vector<8x128xf32>
    %49 = arith.mulf %47, %48 : vector<8x128xf32>
    %50 = vector.broadcast %5 : vector<1x128xf32> to vector<8x128xf32>
    %51 = arith.addf %49, %50 : vector<8x128xf32>
    %52 = vector.shape_cast %51 : vector<8x128xf32> to vector<1x8x128xf32>
    %c0_22 = arith.constant 0 : index
    %c0_23 = arith.constant 0 : index
    %c0_24 = arith.constant 0 : index
    %c128 = arith.constant 128 : index
    %53 = vector.load %arg5[%c0_22, %c0_23, %c0_24, %c128] : memref<1x2x8x256xf32, #tpu.memory_space<vmem>>, vector<1x1x8x128xf32>
    %54 = vector.shape_cast %53 : vector<1x1x8x128xf32> to vector<1x8x128xf32>
    %55 = vector.shape_cast %52 : vector<1x8x128xf32> to vector<1x1x8x128xf32>
    tpu.vector_store %arg5[%c0_22, %c0_23, %c0_24, %c128], %55 {strides = array<i32>} : memref<1x2x8x256xf32, #tpu.memory_space<vmem>>, vector<1x1x8x128xf32>,
    %56 = vector.extract_strided_slice %3 {offsets = [0, 256], sizes = [8, 128], strides = [1, 1]} : vector<8x512xf32> to vector<8x128xf32>
    %cst_25 = arith.constant dense<0.000000e+00> : vector<8xf32>
    %57 = vector.multi_reduction <add>, %56, %cst_25 [1] : vector<8x128xf32> to vector<8xf32>
    %58 = vector.shape_cast %57 : vector<8xf32> to vector<8x1xf32>
    %cst_26 = arith.constant 7.812500e-03 : f32
    %59 = vector.broadcast %cst_26 : f32 to vector<8x1xf32>
    %60 = arith.mulf %58, %59 : vector<8x1xf32>
    %61 = vector.broadcast %60 : vector<8x1xf32> to vector<8x128xf32>
    %62 = arith.subf %56, %61 : vector<8x128xf32>
    %63 = arith.mulf %62, %62 : vector<8x128xf32>
    %cst_27 = arith.constant dense<0.000000e+00> : vector<8xf32>
    %64 = vector.multi_reduction <add>, %63, %cst_27 [1] : vector<8x128xf32> to vector<8xf32>
    %65 = vector.shape_cast %64 : vector<8xf32> to vector<8x1xf32>
    %cst_28 = arith.constant 7.812500e-03 : f32
    %66 = vector.broadcast %cst_28 : f32 to vector<8x1xf32>
    %67 = arith.mulf %65, %66 : vector<8x1xf32>
    %cst_29 = arith.constant 9.99999974E-6 : f32
    %68 = vector.broadcast %cst_29 : f32 to vector<8x1xf32>
    %69 = arith.addf %67, %68 : vector<8x1xf32>
    %70 = math.rsqrt %69 : vector<8x1xf32>
    %71 = vector.broadcast %70 : vector<8x1xf32> to vector<8x128xf32>
    %72 = arith.mulf %62, %71 : vector<8x128xf32>
    %73 = vector.broadcast %4 : vector<1x128xf32> to vector<8x128xf32>
    %74 = arith.mulf %72, %73 : vector<8x128xf32>
    %75 = vector.broadcast %5 : vector<1x128xf32> to vector<8x128xf32>
    %76 = arith.addf %74, %75 : vector<8x128xf32>
    %77 = vector.shape_cast %76 : vector<8x128xf32> to vector<1x8x128xf32>
    %c0_30 = arith.constant 0 : index
    %c1 = arith.constant 1 : index
    %c0_31 = arith.constant 0 : index
    %c0_32 = arith.constant 0 : index
    %78 = vector.load %arg5[%c0_30, %c1, %c0_31, %c0_32] : memref<1x2x8x256xf32, #tpu.memory_space<vmem>>, vector<1x1x8x128xf32>
    %79 = vector.shape_cast %78 : vector<1x1x8x128xf32> to vector<1x8x128xf32>
    %80 = vector.shape_cast %77 : vector<1x8x128xf32> to vector<1x1x8x128xf32>
    tpu.vector_store %arg5[%c0_30, %c1, %c0_31, %c0_32], %80 {strides = array<i32>} : memref<1x2x8x256xf32, #tpu.memory_space<vmem>>, vector<1x1x8x128xf32>,
    %81 = vector.extract_strided_slice %3 {offsets = [0, 384], sizes = [8, 128], strides = [1, 1]} : vector<8x512xf32> to vector<8x128xf32>
    %cst_33 = arith.constant dense<0.000000e+00> : vector<8xf32>
    %82 = vector.multi_reduction <add>, %81, %cst_33 [1] : vector<8x128xf32> to vector<8xf32>
    %83 = vector.shape_cast %82 : vector<8xf32> to vector<8x1xf32>
    %cst_34 = arith.constant 7.812500e-03 : f32
    %84 = vector.broadcast %cst_34 : f32 to vector<8x1xf32>
    %85 = arith.mulf %83, %84 : vector<8x1xf32>
    %86 = vector.broadcast %85 : vector<8x1xf32> to vector<8x128xf32>
    %87 = arith.subf %81, %86 : vector<8x128xf32>
    %88 = arith.mulf %87, %87 : vector<8x128xf32>
    %cst_35 = arith.constant dense<0.000000e+00> : vector<8xf32>
    %89 = vector.multi_reduction <add>, %88, %cst_35 [1] : vector<8x128xf32> to vector<8xf32>
    %90 = vector.shape_cast %89 : vector<8xf32> to vector<8x1xf32>
    %cst_36 = arith.constant 7.812500e-03 : f32
    %91 = vector.broadcast %cst_36 : f32 to vector<8x1xf32>
    %92 = arith.mulf %90, %91 : vector<8x1xf32>
    %cst_37 = arith.constant 9.99999974E-6 : f32
    %93 = vector.broadcast %cst_37 : f32 to vector<8x1xf32>
    %94 = arith.addf %92, %93 : vector<8x1xf32>
    %95 = math.rsqrt %94 : vector<8x1xf32>
    %96 = vector.broadcast %95 : vector<8x1xf32> to vector<8x128xf32>
    %97 = arith.mulf %87, %96 : vector<8x128xf32>
    %98 = vector.broadcast %4 : vector<1x128xf32> to vector<8x128xf32>
    %99 = arith.mulf %97, %98 : vector<8x128xf32>
    %100 = vector.broadcast %5 : vector<1x128xf32> to vector<8x128xf32>
    %101 = arith.addf %99, %100 : vector<8x128xf32>
    %102 = vector.shape_cast %101 : vector<8x128xf32> to vector<1x8x128xf32>
    %c0_38 = arith.constant 0 : index
    %c1_39 = arith.constant 1 : index
    %c0_40 = arith.constant 0 : index
    %c128_41 = arith.constant 128 : index
    %103 = vector.load %arg5[%c0_38, %c1_39, %c0_40, %c128_41] : memref<1x2x8x256xf32, #tpu.memory_space<vmem>>, vector<1x1x8x128xf32>
    %104 = vector.shape_cast %103 : vector<1x1x8x128xf32> to vector<1x8x128xf32>
    %105 = vector.shape_cast %102 : vector<1x8x128xf32> to vector<1x1x8x128xf32>
    tpu.vector_store %arg5[%c0_38, %c1_39, %c0_40, %c128_41], %105 {strides = array<i32>} : memref<1x2x8x256xf32, #tpu.memory_space<vmem>>, vector<1x1x8x128xf32>,
    return
  }
  func.func @transform_0(%arg0: i32) -> (i32, i32, i32) {
    %c0_i32 = arith.constant 0 : i32
    %c0_i32_0 = arith.constant 0 : i32
    %c0_i32_1 = arith.constant 0 : i32
    return %arg0, %c0_i32, %c0_i32_0 : i32, i32, i32
  }
  func.func @transform_1(%arg0: i32) -> (i32, i32) {
    %c0_i32 = arith.constant 0 : i32
    %c0_i32_0 = arith.constant 0 : i32
    %c0_i32_1 = arith.constant 0 : i32
    return %c0_i32, %c0_i32_0 : i32, i32
  }
  func.func @transform_2(%arg0: i32) -> (i32, i32) {
    %c0_i32 = arith.constant 0 : i32
    %c0_i32_0 = arith.constant 0 : i32
    %c0_i32_1 = arith.constant 0 : i32
    return %c0_i32, %c0_i32_0 : i32, i32
  }
  func.func @transform_3(%arg0: i32) -> (i32, i32) {
    %c0_i32 = arith.constant 0 : i32
    %c0_i32_0 = arith.constant 0 : i32
    %c0_i32_1 = arith.constant 0 : i32
    return %c0_i32, %c0_i32_0 : i32, i32
  }
  func.func @transform_4(%arg0: i32) -> (i32, i32, i32, i32) {
    %c0_i32 = arith.constant 0 : i32
    %c0_i32_0 = arith.constant 0 : i32
    %c0_i32_1 = arith.constant 0 : i32
    %c0_i32_2 = arith.constant 0 : i32
    return %arg0, %c0_i32, %c0_i32_0, %c0_i32_1 : i32, i32, i32, i32
  }
}

</mosaic_0001>

<llo_original>
// kernel: tpu_custom_call.1
$region0: #{tpu_custom_call.1}
  #allocation0 [shape = 'u32[]', space=smem, size = 0x4, offset = 0x4, fixed_abs, tag = 'smem constant byte address 0x4 - core index']
  #allocation1 [shape = 'u32[144,128]{1,0:T(1,128)}', space=vmem, size = 0x12000, scoped, tag = 'internal scratch']
  %s0 = inlined_call_operand.hbm [shape: f32[2,8,256], index: 0, kind: input, shape index: {}]
  %s1 = inlined_call_operand.hbm [shape: f32[256,512], index: 1, kind: input, shape index: {}]
  %s2 = inlined_call_operand.vmem [shape: f32[1,128], index: 2, kind: input, shape index: {}]
  %s3 = inlined_call_operand.vmem [shape: f32[1,128], index: 3, kind: input, shape index: {}]
  %s4 = inlined_call_operand.hbm [shape: f32[2,2,8,256], index: 4, kind: output, shape index: {}]
  %s5 = sld [smem:[#allocation0]]
  $region57: #{tpu_custom_call.1} parent=0
    _
  %s7 = ssub.s32 1, %s5
  %s8 = scalar_select 0, %s7, %s5
  $region1: #{tpu_custom_call.1} parent=0
    #allocation2 [shape = 'u8[16384]{0}', space=vmem, size = 0x4000, scoped, tag = 'input window, operand 0']
    #allocation3 [shape = 's32[2]{0}', space=sflag, size = 0x8, scoped, tag = 'scoped memory for tpu_custom_call.1']
    #allocation4 [shape = 's32[2]{0}', space=sflag, size = 0x8, scoped, tag = 'scoped memory for tpu_custom_call.1']
    #allocation5 [shape = 'u8[524288]{0}', space=vmem, size = 0x80000, scoped, tag = 'input window, operand 1, single buffered']
    #allocation6 [shape = 's32[1]{0}', space=sflag, size = 0x4, scoped, tag = 'scoped memory for tpu_custom_call.1']
    #allocation7 [shape = 'u8[32768]{0}', space=vmem, size = 0x8000, scoped, tag = 'output window, operand 0']
    %9 = vsyncpa [#allocation3], 0
    %s10 = scalar_lea.sflag [#allocation3], 1
    %11 = vsyncpa %s10, 0
    %12 = vsyncpa [#allocation6], 0
    %13 = vsyncpa [#allocation4], 0
    %s14 = scalar_lea.sflag [#allocation4], 1
    %15 = vsyncpa %s14, 0
    loop: start=0, step=1, limit=4
    $region2: #{tpu_custom_call.1} parent=1 // loop_pre_header
      _
    $region3: #{tpu_custom_call.1} parent=1 // loop_header
      %s17 = sphi 0, %s21
      %p18 = scmp.ge.s32.totalorder %s17, 4
      %s27 = sphi 0, %s29
      %s30 = sphi 0, %s27
      %s31 = sphi 0, %s30
      %s47 = sphi 0, %s31
      %s51 = sphi 0, %s51
      %s53 = sphi 0, %s51
      %s54 = sphi 0, %s53
      %s68 = sphi 0, %s54
      %s72 = sphi 0, %s72
      %s74 = sphi 0, %s72
      %s75 = sphi 0, %s74
      %s89 = sphi 0, %s75
      %s93 = sphi 0, %s93
      %s95 = sphi 0, %s93
      %s96 = sphi 0, %s95
      %s110 = sphi 0, %s96
      %s116 = sphi 0, %s118
      %s119 = sphi 0, %s116
      %s120 = sphi 0, %s119
      %s136 = sphi 0, %s120
    $region4: #{tpu_custom_call.1} parent=1 // loop_header_branch
      %20 = sbr.rel (%p18) target = $region8
    $region5: #{tpu_custom_call.1} parent=1 // loop_body
      %s22 = ssub.s32 %s17, 1
      %s23 = ssub.s32 %s17, 2
      %s24 = sadd.s32 %s17, 1
      %s25 = ssub.s32 %s17, %s24
      %p26 = scmp.eq.s32.totalorder %s25, 0
      %s28 = sadd.s32 %s27, 1
      %s29 = scalar_select %p26, %s27, %s28
      %p32 = pneg %p26
      %p33 = scmp.eq.s32.totalorder %s17, 1
      %p34 = por %p32, %p33
      %p35 = scmp.ne.s32.totalorder %s27, %s30
      %p36 = scmp.eq.s32.totalorder %s17, 0
      %p37 = por %p35, %p36
      %p38 = scmp.ne.s32.totalorder %s27, %s30
      %p39 = scmp.eq.s32.totalorder %s22, 1
      %p40 = por %p38, %p39
      %p41 = scmp.ne.s32.totalorder %s30, %s31
      %p42 = scmp.eq.s32.totalorder %s22, 0
      %p43 = por %p41, %p42
      %p44 = scmp.ne.s32.totalorder %s30, %s31
      %p45 = scmp.eq.s32.totalorder %s23, 1
      %p46 = por %p44, %p45
      %p48 = scmp.ne.s32.totalorder %s31, %s47
      %p49 = scmp.eq.s32.totalorder %s23, 0
      %p50 = por %p48, %p49
      %s52 = sadd.s32 %s51, 1
      %p55 = scmp.eq.s32.totalorder %s17, 1
      %p56 = scmp.ne.s32.totalorder %s51, %s53
      %p57 = scmp.eq.s32.totalorder %s17, 0
      %p58 = por %p56, %p57
      %p59 = scmp.ne.s32.totalorder %s51, %s53
      %p60 = scmp.eq.s32.totalorder %s22, 1
      %p61 = por %p59, %p60
      %p62 = scmp.ne.s32.totalorder %s53, %s54
      %p63 = scmp.eq.s32.totalorder %s22, 0
      %p64 = por %p62, %p63
      %p65 = scmp.ne.s32.totalorder %s53, %s54
      %p66 = scmp.eq.s32.totalorder %s23, 1
      %p67 = por %p65, %p66
      %p69 = scmp.ne.s32.totalorder %s54, %s68
      %p70 = scmp.eq.s32.totalorder %s23, 0
      %p71 = por %p69, %p70
      %s73 = sadd.s32 %s72, 1
      %p76 = scmp.eq.s32.totalorder %s17, 1
      %p77 = scmp.ne.s32.totalorder %s72, %s74
      %p78 = scmp.eq.s32.totalorder %s17, 0
      %p79 = por %p77, %p78
      %p80 = scmp.ne.s32.totalorder %s72, %s74
      %p81 = scmp.eq.s32.totalorder %s22, 1
      %p82 = por %p80, %p81
      %p83 = scmp.ne.s32.totalorder %s74, %s75
      %p84 = scmp.eq.s32.totalorder %s22, 0
      %p85 = por %p83, %p84
      %p86 = scmp.ne.s32.totalorder %s74, %s75
      %p87 = scmp.eq.s32.totalorder %s23, 1
      %p88 = por %p86, %p87
      %p90 = scmp.ne.s32.totalorder %s75, %s89
      %p91 = scmp.eq.s32.totalorder %s23, 0
      %p92 = por %p90, %p91
      %s94 = sadd.s32 %s93, 1
      %p97 = scmp.eq.s32.totalorder %s17, 1
      %p98 = scmp.ne.s32.totalorder %s93, %s95
      %p99 = scmp.eq.s32.totalorder %s17, 0
      %p100 = por %p98, %p99
      %p101 = scmp.ne.s32.totalorder %s93, %s95
      %p102 = scmp.eq.s32.totalorder %s22, 1
      %p103 = por %p101, %p102
      %p104 = scmp.ne.s32.totalorder %s95, %s96
      %p105 = scmp.eq.s32.totalorder %s22, 0
      %p106 = por %p104, %p105
      %p107 = scmp.ne.s32.totalorder %s95, %s96
      %p108 = scmp.eq.s32.totalorder %s23, 1
      %p109 = por %p107, %p108
      %p111 = scmp.ne.s32.totalorder %s96, %s110
      %p112 = scmp.eq.s32.totalorder %s23, 0
      %p113 = por %p111, %p112
      %s114 = ssub.s32 %s17, %s24
      %p115 = scmp.eq.s32.totalorder %s114, 0
      %s117 = sadd.s32 %s116, 1
      %s118 = scalar_select %p115, %s116, %s117
      %p121 = pneg %p115
      %p122 = scmp.eq.s32.totalorder %s17, 1
      %p123 = por %p121, %p122
      %p124 = scmp.ne.s32.totalorder %s116, %s119
      %p125 = scmp.eq.s32.totalorder %s17, 0
      %p126 = por %p124, %p125
      %p127 = scmp.ne.s32.totalorder %s116, %s119
      %p128 = scmp.eq.s32.totalorder %s22, 1
      %p129 = por %p127, %p128
      %p130 = scmp.ne.s32.totalorder %s119, %s120
      %p131 = scmp.eq.s32.totalorder %s22, 0
      %p132 = por %p130, %p131
      %p133 = scmp.ne.s32.totalorder %s119, %s120
      %p134 = scmp.eq.s32.totalorder %s23, 1
      %p135 = por %p133, %p134
      %p137 = scmp.ne.s32.totalorder %s120, %s136
      %p138 = scmp.eq.s32.totalorder %s23, 0
      %p139 = por %p137, %p138
      %p140 = scmp.le.s32.totalorder 1, %s17
      %p141 = scmp.lt.s32.totalorder %s17, 3
      %p142 = pnand %p140, %p141
      %p143 = pneg %p142
      // Predicated region
      $region9: #{tpu_custom_call.1} parent=5 // pred_check
        _
      $region10: #{tpu_custom_call.1} parent=5 // pred_check_branch
        %145 = sbr.rel (%p142) target = $region12
      $region11: #{tpu_custom_call.1} parent=5 // pred_region
        %s146 = ssub.s32 %s17, 1
        // Predicated region
        $region13: #{tpu_custom_call.1} parent=11 // pred_check
          %p147 = pneg %p64
        $region14: #{tpu_custom_call.1} parent=11 // pred_check_branch
          %149 = sbr.rel (%p147) target = $region16
        $region15: #{tpu_custom_call.1} parent=11 // pred_region
          %s151 = ssub.s32 16384, 16384
          %152 = vsyncadd [#allocation6], %s151
          %s153 = sshll.u32 [#allocation5], 4
          %s154 = int_to_ptr.vmem [resolvable:$true] %s153
          %159 = dma.hbm_to_vmem [thread:$0]  %s1, 16384, %s154, [#allocation6], 512, 512, 32
        $region16: #{tpu_custom_call.1} parent=11 // pred_fallthru
          _
        // Predicated region
        $region17: #{tpu_custom_call.1} parent=11 // pred_check
          %p160 = pneg %p85
        $region18: #{tpu_custom_call.1} parent=11 // pred_check_branch
          %162 = sbr.rel (%p160) target = $region20
        $region19: #{tpu_custom_call.1} parent=11 // pred_region
          _
        $region20: #{tpu_custom_call.1} parent=11 // pred_fallthru
          _
        // Predicated region
        $region21: #{tpu_custom_call.1} parent=11 // pred_check
          %p163 = pneg %p106
        $region22: #{tpu_custom_call.1} parent=11 // pred_check_branch
          %165 = sbr.rel (%p163) target = $region24
        $region23: #{tpu_custom_call.1} parent=11 // pred_region
          _
        $region24: #{tpu_custom_call.1} parent=11 // pred_fallthru
          _
      $region12: #{tpu_custom_call.1} parent=5 // pred_fallthru
        _
      %p166 = scmp.lt.s32.totalorder %s17, 2
      // Predicated region
      $region25: #{tpu_custom_call.1} parent=5 // pred_check
        %p167 = pneg %p166
      $region26: #{tpu_custom_call.1} parent=5 // pred_check_branch
        %169 = sbr.rel (%p167) target = $region28
      $region27: #{tpu_custom_call.1} parent=5 // pred_region
        // Predicated region
        $region29: #{tpu_custom_call.1} parent=27 // pred_check
          %p170 = pneg %p37
        $region30: #{tpu_custom_call.1} parent=27 // pred_check_branch
          %172 = sbr.rel (%p170) target = $region32
        $region31: #{tpu_custom_call.1} parent=27 // pred_region
          %s173 = sand.u32 %s27, 1
          %s174 = scalar_lea.sflag [#allocation3], %s173
          %s175 = sand.u32 %s27, 1
          %s176 = smul.addr %s175, 16
          %s177 = scalar_lea.vmem [#allocation2], %s176
          %s179 = ssub.s32 256, 256
          %180 = vsyncadd %s174, %s179
          %s181 = smul.addr %s17, 2
          %s182 = smul.addr %s181, 128
          %s183 = scalar_lea.hbm %s0, %s182
          %s185 = sshll.u32 %s177, 4
          %s186 = int_to_ptr.vmem [resolvable:$true] %s185
          %188 = dma.hbm_to_vmem [thread:$0]  %s183, 256, %s186, %s174
        $region32: #{tpu_custom_call.1} parent=27 // pred_fallthru
          _
      $region28: #{tpu_custom_call.1} parent=5 // pred_fallthru
        _
      %p189 = scmp.le.s32.totalorder 1, %s17
      %p190 = scmp.lt.s32.totalorder %s17, 3
      %p191 = pnand %p189, %p190
      %p192 = pneg %p191
      // Predicated region
      $region33: #{tpu_custom_call.1} parent=5 // pred_check
        _
      $region34: #{tpu_custom_call.1} parent=5 // pred_check_branch
        %194 = sbr.rel (%p191) target = $region36
      $region35: #{tpu_custom_call.1} parent=5 // pred_region
        %s195 = ssub.s32 %s17, 1
        %s196 = sand.u32 %s30, 1
        %s197 = scalar_lea.sflag [#allocation3], %s196
        %s198 = sand.u32 %s30, 1
        %s199 = smul.addr %s198, 16
        %s200 = scalar_lea.vmem [#allocation2], %s199
        // Predicated region
        $region37: #{tpu_custom_call.1} parent=35 // pred_check
          %p201 = pneg %p43
        $region38: #{tpu_custom_call.1} parent=35 // pred_check_branch
          %203 = sbr.rel (%p201) target = $region40
        $region39: #{tpu_custom_call.1} parent=35 // pred_region
          %204 = dma.done %s197, 256
        $region40: #{tpu_custom_call.1} parent=35 // pred_fallthru
          _
        // Predicated region
        $region41: #{tpu_custom_call.1} parent=35 // pred_check
          %p205 = pneg %p64
        $region42: #{tpu_custom_call.1} parent=35 // pred_check_branch
          %207 = sbr.rel (%p205) target = $region44
        $region43: #{tpu_custom_call.1} parent=35 // pred_region
          %208 = dma.done [#allocation6], 16384
        $region44: #{tpu_custom_call.1} parent=35 // pred_fallthru
          _
        %s209 = sand.u32 %s30, 1
        %s210 = scalar_lea.sflag [#allocation3], %s209
        %s211 = sand.u32 %s30, 1
        %s212 = smul.addr %s211, 16
        %s213 = scalar_lea.vmem [#allocation2], %s212
        %p214 = pneg %p43
        %p215 = pneg %p40
        %p216 = pneg %p64
        %p217 = pneg %p61
        %p218 = pneg %p85
        %p219 = pneg %p82
        %p220 = pneg %p106
        %p221 = pneg %p103
        %p222 = pneg %p132
        %p223 = pneg %p129
        %s224 = sand.u32 %s119, 1
        %s225 = scalar_lea.sflag [#allocation4], %s224
        %s226 = sand.u32 %s119, 1
        %s227 = smul.addr %s226, 32
        %s228 = scalar_lea.vmem [#allocation7], %s227
        %v229 = vld [vmem:[%s200] sm:$0xff]
        %v230 = vld [vmem:[%s200 + $0x8] sm:$0xff]
        %v231 = vld [vmem:[#allocation5] sm:$0xff]
        %v232 = vld [vmem:[#allocation5 + $0x8] sm:$0xff]
        %v233 = vld [vmem:[#allocation5 + $0x10] sm:$0xff]
        %v234 = vld [vmem:[#allocation5 + $0x18] sm:$0xff]
        %v235 = vld [vmem:[#allocation5 + $0x20] sm:$0xff]
        %v236 = vld [vmem:[#allocation5 + $0x28] sm:$0xff]
        %v237 = vld [vmem:[#allocation5 + $0x30] sm:$0xff]
        %v238 = vld [vmem:[#allocation5 + $0x38] sm:$0xff]
        %v239 = vld [vmem:[#allocation5 + $0x40] sm:$0xff]
        %v240 = vld [vmem:[#allocation5 + $0x48] sm:$0xff]
        %v241 = vld [vmem:[#allocation5 + $0x50] sm:$0xff]
        %v242 = vld [vmem:[#allocation5 + $0x58] sm:$0xff]
        %v243 = vld [vmem:[#allocation5 + $0x60] sm:$0xff]
        %v244 = vld [vmem:[#allocation5 + $0x68] sm:$0xff]
        %v245 = vld [vmem:[#allocation5 + $0x70] sm:$0xff]
        %v246 = vld [vmem:[#allocation5 + $0x78] sm:$0xff]
        %v247 = vld [vmem:[#allocation5 + $0x80] sm:$0xff]
        %v248 = vld [vmem:[#allocation5 + $0x88] sm:$0xff]
        %v249 = vld [vmem:[#allocation5 + $0x90] sm:$0xff]
        %v250 = vld [vmem:[#allocation5 + $0x98] sm:$0xff]
        %v251 = vld [vmem:[#allocation5 + $0xa0] sm:$0xff]
        %v252 = vld [vmem:[#allocation5 + $0xa8] sm:$0xff]
        %v253 = vld [vmem:[#allocation5 + $0xb0] sm:$0xff]
        %v254 = vld [vmem:[#allocation5 + $0xb8] sm:$0xff]
        %v255 = vld [vmem:[#allocation5 + $0xc0] sm:$0xff]
        %v256 = vld [vmem:[#allocation5 + $0xc8] sm:$0xff]
        %v257 = vld [vmem:[#allocation5 + $0xd0] sm:$0xff]
        %v258 = vld [vmem:[#allocation5 + $0xd8] sm:$0xff]
        %v259 = vld [vmem:[#allocation5 + $0xe0] sm:$0xff]
        %v260 = vld [vmem:[#allocation5 + $0xe8] sm:$0xff]
        %v261 = vld [vmem:[#allocation5 + $0xf0] sm:$0xff]
        %v262 = vld [vmem:[#allocation5 + $0xf8] sm:$0xff]
        %v263 = vld [vmem:[#allocation5 + $0x100] sm:$0xff]
        %v264 = vld [vmem:[#allocation5 + $0x108] sm:$0xff]
        %v265 = vld [vmem:[#allocation5 + $0x110] sm:$0xff]
        %v266 = vld [vmem:[#allocation5 + $0x118] sm:$0xff]
        %v267 = vld [vmem:[#allocation5 + $0x120] sm:$0xff]
        %v268 = vld [vmem:[#allocation5 + $0x128] sm:$0xff]
        %v269 = vld [vmem:[#allocation5 + $0x130] sm:$0xff]
        %v270 = vld [vmem:[#allocation5 + $0x138] sm:$0xff]
        %v271 = vld [vmem:[#allocation5 + $0x140] sm:$0xff]
        %v272 = vld [vmem:[#allocation5 + $0x148] sm:$0xff]
        %v273 = vld [vmem:[#allocation5 + $0x150] sm:$0xff]
        %v274 = vld [vmem:[#allocation5 + $0x158] sm:$0xff]
        %v275 = vld [vmem:[#allocation5 + $0x160] sm:$0xff]
        %v276 = vld [vmem:[#allocation5 + $0x168] sm:$0xff]
        %v277 = vld [vmem:[#allocation5 + $0x170] sm:$0xff]
        %v278 = vld [vmem:[#allocation5 + $0x178] sm:$0xff]
        %v279 = vld [vmem:[#allocation5 + $0x180] sm:$0xff]
        %v280 = vld [vmem:[#allocation5 + $0x188] sm:$0xff]
        %v281 = vld [vmem:[#allocation5 + $0x190] sm:$0xff]
        %v282 = vld [vmem:[#allocation5 + $0x198] sm:$0xff]
        %v283 = vld [vmem:[#allocation5 + $0x1a0] sm:$0xff]
        %v284 = vld [vmem:[#allocation5 + $0x1a8] sm:$0xff]
        %v285 = vld [vmem:[#allocation5 + $0x1b0] sm:$0xff]
        %v286 = vld [vmem:[#allocation5 + $0x1b8] sm:$0xff]
        %v287 = vld [vmem:[#allocation5 + $0x1c0] sm:$0xff]
        %v288 = vld [vmem:[#allocation5 + $0x1c8] sm:$0xff]
        %v289 = vld [vmem:[#allocation5 + $0x1d0] sm:$0xff]
        %v290 = vld [vmem:[#allocation5 + $0x1d8] sm:$0xff]
        %v291 = vld [vmem:[#allocation5 + $0x1e0] sm:$0xff]
        %v292 = vld [vmem:[#allocation5 + $0x1e8] sm:$0xff]
        %v293 = vld [vmem:[#allocation5 + $0x1f0] sm:$0xff]
        %v294 = vld [vmem:[#allocation5 + $0x1f8] sm:$0xff]
        %v295 = vld [vmem:[#allocation5 + $0x200] sm:$0xff]
        %v296 = vld [vmem:[#allocation5 + $0x208] sm:$0xff]
        %v297 = vld [vmem:[#allocation5 + $0x210] sm:$0xff]
        %v298 = vld [vmem:[#allocation5 + $0x218] sm:$0xff]
        %v299 = vld [vmem:[#allocation5 + $0x220] sm:$0xff]
        %v300 = vld [vmem:[#allocation5 + $0x228] sm:$0xff]
        %v301 = vld [vmem:[#allocation5 + $0x230] sm:$0xff]
        %v302 = vld [vmem:[#allocation5 + $0x238] sm:$0xff]
        %v303 = vld [vmem:[#allocation5 + $0x240] sm:$0xff]
        %v304 = vld [vmem:[#allocation5 + $0x248] sm:$0xff]
        %v305 = vld [vmem:[#allocation5 + $0x250] sm:$0xff]
        %v306 = vld [vmem:[#allocation5 + $0x258] sm:$0xff]
        %v307 = vld [vmem:[#allocation5 + $0x260] sm:$0xff]
        %v308 = vld [vmem:[#allocation5 + $0x268] sm:$0xff]
        %v309 = vld [vmem:[#allocation5 + $0x270] sm:$0xff]
        %v310 = vld [vmem:[#allocation5 + $0x278] sm:$0xff]
        %v311 = vld [vmem:[#allocation5 + $0x280] sm:$0xff]
        %v312 = vld [vmem:[#allocation5 + $0x288] sm:$0xff]
        %v313 = vld [vmem:[#allocation5 + $0x290] sm:$0xff]
        %v314 = vld [vmem:[#allocation5 + $0x298] sm:$0xff]
        %v315 = vld [vmem:[#allocation5 + $0x2a0] sm:$0xff]
        %v316 = vld [vmem:[#allocation5 + $0x2a8] sm:$0xff]
        %v317 = vld [vmem:[#allocation5 + $0x2b0] sm:$0xff]
        %v318 = vld [vmem:[#allocation5 + $0x2b8] sm:$0xff]
        %v319 = vld [vmem:[#allocation5 + $0x2c0] sm:$0xff]
        %v320 = vld [vmem:[#allocation5 + $0x2c8] sm:$0xff]
        %v321 = vld [vmem:[#allocation5 + $0x2d0] sm:$0xff]
        %v322 = vld [vmem:[#allocation5 + $0x2d8] sm:$0xff]
        %v323 = vld [vmem:[#allocation5 + $0x2e0] sm:$0xff]
        %v324 = vld [vmem:[#allocation5 + $0x2e8] sm:$0xff]
        %v325 = vld [vmem:[#allocation5 + $0x2f0] sm:$0xff]
        %v326 = vld [vmem:[#allocation5 + $0x2f8] sm:$0xff]
        %v327 = vld [vmem:[#allocation5 + $0x300] sm:$0xff]
        %v328 = vld [vmem:[#allocation5 + $0x308] sm:$0xff]
        %v329 = vld [vmem:[#allocation5 + $0x310] sm:$0xff]
        %v330 = vld [vmem:[#allocation5 + $0x318] sm:$0xff]
        %v331 = vld [vmem:[#allocation5 + $0x320] sm:$0xff]
        %v332 = vld [vmem:[#allocation5 + $0x328] sm:$0xff]
        %v333 = vld [vmem:[#allocation5 + $0x330] sm:$0xff]
        %v334 = vld [vmem:[#allocation5 + $0x338] sm:$0xff]
        %v335 = vld [vmem:[#allocation5 + $0x340] sm:$0xff]
        %v336 = vld [vmem:[#allocation5 + $0x348] sm:$0xff]
        %v337 = vld [vmem:[#allocation5 + $0x350] sm:$0xff]
        %v338 = vld [vmem:[#allocation5 + $0x358] sm:$0xff]
        %v339 = vld [vmem:[#allocation5 + $0x360] sm:$0xff]
        %v340 = vld [vmem:[#allocation5 + $0x368] sm:$0xff]
        %v341 = vld [vmem:[#allocation5 + $0x370] sm:$0xff]
        %v342 = vld [vmem:[#allocation5 + $0x378] sm:$0xff]
        %v343 = vld [vmem:[#allocation5 + $0x380] sm:$0xff]
        %v344 = vld [vmem:[#allocation5 + $0x388] sm:$0xff]
        %v345 = vld [vmem:[#allocation5 + $0x390] sm:$0xff]
        %v346 = vld [vmem:[#allocation5 + $0x398] sm:$0xff]
        %v347 = vld [vmem:[#allocation5 + $0x3a0] sm:$0xff]
        %v348 = vld [vmem:[#allocation5 + $0x3a8] sm:$0xff]
        %v349 = vld [vmem:[#allocation5 + $0x3b0] sm:$0xff]
        %v350 = vld [vmem:[#allocation5 + $0x3b8] sm:$0xff]
        %v351 = vld [vmem:[#allocation5 + $0x3c0] sm:$0xff]
        %v352 = vld [vmem:[#allocation5 + $0x3c8] sm:$0xff]
        %v353 = vld [vmem:[#allocation5 + $0x3d0] sm:$0xff]
        %v354 = vld [vmem:[#allocation5 + $0x3d8] sm:$0xff]
        %v355 = vld [vmem:[#allocation5 + $0x3e0] sm:$0xff]
        %v356 = vld [vmem:[#allocation5 + $0x3e8] sm:$0xff]
        %v357 = vld [vmem:[#allocation5 + $0x3f0] sm:$0xff]
        %v358 = vld [vmem:[#allocation5 + $0x3f8] sm:$0xff]
        %359 = vmatprep.subr.mxu0 %v232
        %360 = vmatpush1.msra.mxu0 %v231
        %361 = vmatprep.subr.mxu0 %v236
        %362 = vmatpush1.msra.mxu0 %v235
        %363 = vmatprep.subr.mxu0 %v240
        %364 = vmatpush1.msra.mxu0 %v239
        %365 = vmatprep.subr.mxu0 %v244
        %366 = vmatpush1.msra.mxu0 %v243
        %367 = vmatprep.subr.mxu0 %v248
        %368 = vmatpush1.msra.mxu0 %v247
        %369 = vmatprep.subr.mxu0 %v252
        %370 = vmatpush1.msra.mxu0 %v251
        %371 = vmatprep.subr.mxu0 %v256
        %372 = vmatpush1.msra.mxu0 %v255
        %373 = vmatprep.subr.mxu0 %v260
        %374 = vmatpush1.msra.mxu0 %v259
        %375 = vmatprep.subr.mxu0 %v264
        %376 = vmatpush1.msra.mxu0 %v263
        %377 = vmatprep.subr.mxu0 %v268
        %378 = vmatpush1.msra.mxu0 %v267
        %379 = vmatprep.subr.mxu0 %v272
        %380 = vmatpush1.msra.mxu0 %v271
        %381 = vmatprep.subr.mxu0 %v276
        %382 = vmatpush1.msra.mxu0 %v275
        %383 = vmatprep.subr.mxu0 %v280
        %384 = vmatpush1.msra.mxu0 %v279
        %385 = vmatprep.subr.mxu0 %v284
        %386 = vmatpush1.msra.mxu0 %v283
        %387 = vmatprep.subr.mxu0 %v288
        %388 = vmatpush1.msra.mxu0 %v287
        %389 = vmatprep.subr.mxu0 %v292
        %390 = vmatpush1.msra.mxu0 %v291
        %391 = vmatprep.subr.mxu0 %v296
        %392 = vmatpush1.msra.mxu0 %v295
        %393 = vmatprep.subr.mxu0 %v300
        %394 = vmatpush1.msra.mxu0 %v299
        %395 = vmatprep.subr.mxu0 %v304
        %396 = vmatpush1.msra.mxu0 %v303
        %397 = vmatprep.subr.mxu0 %v308
        %398 = vmatpush1.msra.mxu0 %v307
        %399 = vmatprep.subr.mxu0 %v312
        %400 = vmatpush1.msra.mxu0 %v311
        %401 = vmatprep.subr.mxu0 %v316
        %402 = vmatpush1.msra.mxu0 %v315
        %403 = vmatprep.subr.mxu0 %v320
        %404 = vmatpush1.msra.mxu0 %v319
        %405 = vmatprep.subr.mxu0 %v324
        %406 = vmatpush1.msra.mxu0 %v323
        %407 = vmatprep.subr.mxu0 %v328
        %408 = vmatpush1.msra.mxu0 %v327
        %409 = vmatprep.subr.mxu0 %v332
        %410 = vmatpush1.msra.mxu0 %v331
        %411 = vmatprep.subr.mxu0 %v336
        %412 = vmatpush1.msra.mxu0 %v335
        %413 = vmatprep.subr.mxu0 %v340
        %414 = vmatpush1.msra.mxu0 %v339
        %415 = vmatprep.subr.mxu0 %v344
        %416 = vmatpush1.msra.mxu0 %v343
        %417 = vmatprep.subr.mxu0 %v348
        %418 = vmatpush1.msra.mxu0 %v347
        %419 = vmatprep.subr.mxu0 %v352
        %420 = vmatpush1.msra.mxu0 %v351
        %421 = vmatprep.subr.mxu0 %v356
        %422 = vmatpush1.msra.mxu0 %v355
        %423 = vmatprep.mubr.f32.mxu0 %v230
        %424 = vmatmul.mubr.f32.gmra.mrb[0].mxu0 %v229
        %v425 = vpop.f32.mrb[0].mxu0
        %v426 = vadd.f32 0.0, %v425
        %v427 = vpop.f32.mrb[0].mxu0
        %v428 = vadd.f32 0.0, %v427
        %429 = vdwg.mxu0
        %430 = vmatprep.subr.mxu0 %v234
        %431 = vmatpush1.msra.mxu0 %v233
        %432 = vmatprep.subr.mxu0 %v238
        %433 = vmatpush1.msra.mxu0 %v237
        %434 = vmatprep.subr.mxu0 %v242
        %435 = vmatpush1.msra.mxu0 %v241
        %436 = vmatprep.subr.mxu0 %v246
        %437 = vmatpush1.msra.mxu0 %v245
        %438 = vmatprep.subr.mxu0 %v250
        %439 = vmatpush1.msra.mxu0 %v249
        %440 = vmatprep.subr.mxu0 %v254
        %441 = vmatpush1.msra.mxu0 %v253
        %442 = vmatprep.subr.mxu0 %v258
        %443 = vmatpush1.msra.mxu0 %v257
        %444 = vmatprep.subr.mxu0 %v262
        %445 = vmatpush1.msra.mxu0 %v261
        %446 = vmatprep.subr.mxu0 %v266
        %447 = vmatpush1.msra.mxu0 %v265
        %448 = vmatprep.subr.mxu0 %v270
        %449 = vmatpush1.msra.mxu0 %v269
        %450 = vmatprep.subr.mxu0 %v274
        %451 = vmatpush1.msra.mxu0 %v273
        %452 = vmatprep.subr.mxu0 %v278
        %453 = vmatpush1.msra.mxu0 %v277
        %454 = vmatprep.subr.mxu0 %v282
        %455 = vmatpush1.msra.mxu0 %v281
        %456 = vmatprep.subr.mxu0 %v286
        %457 = vmatpush1.msra.mxu0 %v285
        %458 = vmatprep.subr.mxu0 %v290
        %459 = vmatpush1.msra.mxu0 %v289
        %460 = vmatprep.subr.mxu0 %v294
        %461 = vmatpush1.msra.mxu0 %v293
        %462 = vmatprep.subr.mxu0 %v298
        %463 = vmatpush1.msra.mxu0 %v297
        %464 = vmatprep.subr.mxu0 %v302
        %465 = vmatpush1.msra.mxu0 %v301
        %466 = vmatprep.subr.mxu0 %v306
        %467 = vmatpush1.msra.mxu0 %v305
        %468 = vmatprep.subr.mxu0 %v310
        %469 = vmatpush1.msra.mxu0 %v309
        %470 = vmatprep.subr.mxu0 %v314
        %471 = vmatpush1.msra.mxu0 %v313
        %472 = vmatprep.subr.mxu0 %v318
        %473 = vmatpush1.msra.mxu0 %v317
        %474 = vmatprep.subr.mxu0 %v322
        %475 = vmatpush1.msra.mxu0 %v321
        %476 = vmatprep.subr.mxu0 %v326
        %477 = vmatpush1.msra.mxu0 %v325
        %478 = vmatprep.subr.mxu0 %v330
        %479 = vmatpush1.msra.mxu0 %v329
        %480 = vmatprep.subr.mxu0 %v334
        %481 = vmatpush1.msra.mxu0 %v333
        %482 = vmatprep.subr.mxu0 %v338
        %483 = vmatpush1.msra.mxu0 %v337
        %484 = vmatprep.subr.mxu0 %v342
        %485 = vmatpush1.msra.mxu0 %v341
        %486 = vmatprep.subr.mxu0 %v346
        %487 = vmatpush1.msra.mxu0 %v345
        %488 = vmatprep.subr.mxu0 %v350
        %489 = vmatpush1.msra.mxu0 %v349
        %490 = vmatprep.subr.mxu0 %v354
        %491 = vmatpush1.msra.mxu0 %v353
        %492 = vmatprep.subr.mxu0 %v358
        %493 = vmatpush1.msra.mxu0 %v357
        %494 = vmatprep.mubr.f32.mxu0 %v230
        %495 = vmatmul.mubr.f32.gmra.mrb[0].mxu0 %v229
        %v496 = vpop.f32.mrb[0].mxu0
        %v497 = vadd.f32 0.0, %v496
        %v498 = vpop.f32.mrb[0].mxu0
        %v499 = vadd.f32 0.0, %v498
        %500 = vdwg.mxu0
        %v501 = vld [vmem:[%s2] sm:$0x1]
        %v502 = vld [vmem:[%s3] sm:$0x1]
        %503 = vadd.xlane.f32.xlu0 %v426
        %v504 = vpop.xlane.xlu0 %503
        %v505 = vmul.f32 %v504, 0.0078125
        %v506 = vsub.f32 %v426, %v505
        %v507 = vmul.f32 %v506, %v506
        %508 = vadd.xlane.f32.xlu0 %v507
        %v509 = vpop.xlane.xlu0 %508
        %v510 = vmul.f32 %v509, 0.0078125
        %v511 = vadd.f32 %v510, 1e-05
        %v512 = vrsqrt.pop %v511
        %v513 = vmul.f32 %v506, %v512
        %v515 = vlaneseq
        %v516 = vshrl.u32 %v515, 7
        %v517 = vsub.s32 0, %v516
        %v518 = vrot.slane %v501, %v517
        %v520 = vmul.f32 %v513, %v518
        %v522 = vlaneseq
        %v523 = vshrl.u32 %v522, 7
        %v524 = vsub.s32 0, %v523
        %v525 = vrot.slane %v502, %v524
        %v527 = vadd.f32 %v520, %v525
        %528 = vst [vmem:[%s228] sm:$0xff] %v527
        %529 = vadd.xlane.f32.xlu0 %v428
        %v530 = vpop.xlane.xlu0 %529
        %v531 = vmul.f32 %v530, 0.0078125
        %v532 = vsub.f32 %v428, %v531
        %v533 = vmul.f32 %v532, %v532
        %534 = vadd.xlane.f32.xlu0 %v533
        %v535 = vpop.xlane.xlu0 %534
        %v536 = vmul.f32 %v535, 0.0078125
        %v537 = vadd.f32 %v536, 1e-05
        %v538 = vrsqrt.pop %v537
        %v539 = vmul.f32 %v532, %v538
        %v540 = vmul.f32 %v539, %v518
        %v541 = vadd.f32 %v540, %v525
        %542 = vst [vmem:[%s228 + $0x8] sm:$0xff] %v541
        %543 = vadd.xlane.f32.xlu0 %v497
        %v544 = vpop.xlane.xlu0 %543
        %v545 = vmul.f32 %v544, 0.0078125
        %v546 = vsub.f32 %v497, %v545
        %v547 = vmul.f32 %v546, %v546
        %548 = vadd.xlane.f32.xlu0 %v547
        %v549 = vpop.xlane.xlu0 %548
        %v550 = vmul.f32 %v549, 0.0078125
        %v551 = vadd.f32 %v550, 1e-05
        %v552 = vrsqrt.pop %v551
        %v553 = vmul.f32 %v546, %v552
        %v554 = vmul.f32 %v553, %v518
        %v555 = vadd.f32 %v554, %v525
        %s556 = scalar_lea.vmem %s228, 16 [#allocation7]
        %557 = vst [vmem:[%s556] sm:$0xff] %v555
        %558 = vadd.xlane.f32.xlu0 %v499
        %v559 = vpop.xlane.xlu0 %558
        %v560 = vmul.f32 %v559, 0.0078125
        %v561 = vsub.f32 %v499, %v560
        %v562 = vmul.f32 %v561, %v561
        %563 = vadd.xlane.f32.xlu0 %v562
        %v564 = vpop.xlane.xlu0 %563
        %v565 = vmul.f32 %v564, 0.0078125
        %v566 = vadd.f32 %v565, 1e-05
        %v567 = vrsqrt.pop %v566
        %v568 = vmul.f32 %v561, %v567
        %v569 = vmul.f32 %v568, %v518
        %v570 = vadd.f32 %v569, %v525
        %571 = vst [vmem:[%s556 + $0x8] sm:$0xff] %v570
        %s572 = sand.u32 %s119, 1
        %s573 = scalar_lea.sflag [#allocation4], %s572
        %s574 = sand.u32 %s119, 1
        %s575 = smul.addr %s574, 32
        %s576 = scalar_lea.vmem [#allocation7], %s575
        // Predicated region
        $region45: #{tpu_custom_call.1} parent=35 // pred_check
          %p577 = pneg %p129
        $region46: #{tpu_custom_call.1} parent=35 // pred_check_branch
          %579 = sbr.rel (%p577) target = $region48
        $region47: #{tpu_custom_call.1} parent=35 // pred_region
          %s581 = ssub.s32 512, 512
          %582 = vsyncadd %s573, %s581
          %s583 = smul.addr %s22, 4
          %s584 = smul.addr %s583, 128
          %s585 = scalar_lea.hbm %s4, %s584
          %s586 = sshll.u32 %s576, 4
          %s587 = int_to_ptr.vmem [resolvable:$true] %s586
          %592 = dma.vmem_to_hbm [thread:$0]  %s587, 512, %s585, %s573, 256, 256, 16
        $region48: #{tpu_custom_call.1} parent=35 // pred_fallthru
          _
      $region36: #{tpu_custom_call.1} parent=5 // pred_fallthru
        _
      %p593 = scmp.le.s32.totalorder 2, %s17
      // Predicated region
      $region49: #{tpu_custom_call.1} parent=5 // pred_check
        %p594 = pneg %p593
      $region50: #{tpu_custom_call.1} parent=5 // pred_check_branch
        %596 = sbr.rel (%p594) target = $region52
      $region51: #{tpu_custom_call.1} parent=5 // pred_region
        %s597 = ssub.s32 %s17, 2
        // Predicated region
        $region53: #{tpu_custom_call.1} parent=51 // pred_check
          %p598 = pneg %p135
        $region54: #{tpu_custom_call.1} parent=51 // pred_check_branch
          %600 = sbr.rel (%p598) target = $region56
        $region55: #{tpu_custom_call.1} parent=51 // pred_region
          %s601 = sand.u32 %s120, 1
          %s602 = scalar_lea.sflag [#allocation4], %s601
          %s603 = sand.u32 %s120, 1
          %s604 = smul.addr %s603, 32
          %s605 = scalar_lea.vmem [#allocation7], %s604
          %606 = dma.done %s602, 512
        $region56: #{tpu_custom_call.1} parent=51 // pred_fallthru
          _
      $region52: #{tpu_custom_call.1} parent=5 // pred_fallthru
        _
    $region6: #{tpu_custom_call.1} parent=1 // loop_footer
      %s21 = sadd.s32 1, %s17
    $region7: #{tpu_custom_call.1} parent=1 // loop_footer_branch
      %16 = sbr.rel target = $region3
    $region8: #{tpu_custom_call.1} parent=1 // loop_exit
      _
    %607 = vsyncpa [#allocation3], 1
    %s608 = scalar_lea.sflag [#allocation3], 1
    %609 = vsyncpa %s608, 1
    %610 = vsyncpa [#allocation6], 1
    %611 = vsyncpa [#allocation4], 1
    %s612 = scalar_lea.sflag [#allocation4], 1
    %613 = vsyncpa %s612, 1

</llo_original>
